<compile_context>
chip_gen: v5e
topology: v5e:2x2
jax: 0.10.0
libtpu: 0.0.40
codegen_flags: <defaults>
</compile_context>

<pallas_src>
import functools

import jax
import jax.numpy as jnp
from jax.experimental import pallas as pl
from jax.experimental.pallas import tpu as pltpu


def _round_up(n, m):
    return ((n + m - 1) // m) * m


def _mlp_kernel(xt_ref, w1t_ref, b1_ref, w2t_ref, b2_ref, ot_ref):
    # xt_ref : [in_pad, TILE_B]    batch on lanes
    # w1t_ref: [h_pad, in_pad]     VMEM-resident (constant index_map)
    # b1_ref : [h_pad, 1]          f32
    # w2t_ref: [out_pad, h_pad]    VMEM-resident
    # b2_ref : [out_pad, 1]        f32
    # ot_ref : [out_pad, TILE_B]   lane-dense output tile, consumer dtype
    h = jnp.dot(w1t_ref[...], xt_ref[...], preferred_element_type=jnp.float32)
    h = jnp.maximum(h + b1_ref[...], 0.0)        # f32 bias add + ReLU (VPU)
    h = h.astype(w2t_ref.dtype)                  # no-op in f32; cast if bf16 compute
    out = jnp.dot(w2t_ref[...], h, preferred_element_type=jnp.float32) + b2_ref[...]
    ot_ref[...] = out.astype(ot_ref.dtype)


def prepare_params(w1, b1, w2, b2, *, compute_dtype=jnp.float32):
    """One-time weight prep (transpose + pad). Cache the result across forward calls.

    w1: [input_size, hidden_size], b1: [hidden_size]
    w2: [hidden_size, output_size], b2: [output_size]
    Returns (w1t, b1c, w2t, b2c) ready for blackjack_forward.
    """
    in_size, hidden = w1.shape
    out_size = w2.shape[1]
    in_pad = _round_up(in_size, 8)
    h_pad = _round_up(hidden, 8)
    out_pad = _round_up(out_size, 8)

    # Padded weight rows/cols are zero, so padded K entries contribute nothing.
    w1t = jnp.pad(w1.T.astype(compute_dtype),
                  ((0, h_pad - hidden), (0, in_pad - in_size)))
    w2t = jnp.pad(w2.T.astype(compute_dtype),
                  ((0, out_pad - out_size), (0, h_pad - hidden)))
    # Biases stay f32 and are added post-matmul in-kernel (exact even in bf16 mode).
    b1c = jnp.pad(b1.astype(jnp.float32), (0, h_pad - hidden)).reshape(h_pad, 1)
    b2c = jnp.pad(b2.astype(jnp.float32), (0, out_pad - out_size)).reshape(out_pad, 1)
    return w1t, b1c, w2t, b2c


def blackjack_forward(x, w1t, b1c, w2t, b2c, *, out_size, tile_b=2048):
    """Fused Linear->ReLU->Linear with batch on the lane axis.

    x: [B, input_size]; weights come from prepare_params().
    Returns [B, out_size] in x.dtype.
    """
    B, in_size = x.shape
    h_pad, in_pad = w1t.shape
    out_pad = w2t.shape[0]
    assert in_size <= in_pad, "x feature dim does not match prepared weights"
    cdt = w1t.dtype

    # Batch is the lane axis -> tiles must be multiples of 128.
    tile_b = max(128, _round_up(tile_b, 128))
    b128 = _round_up(B, 128)
    if b128 >= 256:
        # Ensure >= 2 grid steps when the batch allows it so both v7x TensorCores
        # get work under dimension_semantics=("parallel",).
        tile_b = min(tile_b, _round_up(pl.cdiv(b128, 2), 128))
    tile_b = min(tile_b, b128)
    b_pad = _round_up(b128, tile_b)

    # x^T, zero-padded.  Padded feature rows hit zero weight columns (no effect);
    # padded batch columns produce bias-only garbage that the final [:B] slice drops.
    xt = jnp.pad(x.T.astype(cdt), ((0, in_pad - in_size), (0, b_pad - B)))

    grid = (b_pad // tile_b,)
    out_t = pl.pallas_call(
        _mlp_kernel,
        out_shape=jax.ShapeDtypeStruct((out_pad, b_pad), x.dtype),
        grid=grid,
        in_specs=[
            pl.BlockSpec((in_pad, tile_b), lambda i: (0, i)),   # x^T batch tile
            pl.BlockSpec((h_pad, in_pad), lambda i: (0, 0)),    # w1^T resident
            pl.BlockSpec((h_pad, 1), lambda i: (0, 0)),         # b1 resident
            pl.BlockSpec((out_pad, h_pad), lambda i: (0, 0)),   # w2^T resident
            pl.BlockSpec((out_pad, 1), lambda i: (0, 0)),       # b2 resident
        ],
        out_specs=pl.BlockSpec((out_pad, tile_b), lambda i: (0, i)),
        compiler_params=pltpu.CompilerParams(
            dimension_semantics=("parallel",),      # shard batch tiles on v7x
            vmem_limit_bytes=32 * 1024 * 1024,      # working set is < 1 MiB; explicit & safe
        ),
    )(xt, w1t, b1c, w2t, b2c)

    return out_t[:out_size, :B].T


def init_params(key, input_size, hidden_size, output_size):
    """Deterministic init mimicking nn.Linear's U(-1/sqrt(fan_in), 1/sqrt(fan_in))."""
    k1, k2, k3, k4 = jax.random.split(key, 4)
    lim1 = 1.0 / jnp.sqrt(float(input_size))
    lim2 = 1.0 / jnp.sqrt(float(hidden_size))
    # Stored already-transposed relative to PyTorch's [out, in]: here [in, out].
    w1 = jax.random.uniform(k1, (input_size, hidden_size), jnp.float32, -lim1, lim1)
    b1 = jax.random.uniform(k2, (hidden_size,), jnp.float32, -lim1, lim1)
    w2 = jax.random.uniform(k3, (hidden_size, output_size), jnp.float32, -lim2, lim2)
    b2 = jax.random.uniform(k4, (output_size,), jnp.float32, -lim2, lim2)
    return w1, b1, w2, b2


if __name__ == "__main__":
    # BlackJack state vector -> hidden -> action logits.
    batch, input_size, hidden_size, output_size = 8, 8, 32, 4

    key = jax.random.PRNGKey(0)
    kx, kp, kx2 = jax.random.split(key, 3)
    x = jax.random.normal(kx, (batch, input_size), jnp.float32)
    w1, b1, w2, b2 = init_params(kp, input_size, hidden_size, output_size)

    # One-time parameter prep, hoisted out of the forward call path.
    w1t, b1c, w2t, b2c = prepare_params(w1, b1, w2, b2)

    fwd = jax.jit(functools.partial(blackjack_forward, out_size=output_size))

    out = fwd(x, w1t, b1c, w2t, b2c)
    jax.block_until_ready(out)

    ref = jnp.maximum(x @ w1 + b1, 0.0) @ w2 + b2
    assert out.shape == (batch, output_size)
    assert jnp.allclose(out, ref, atol=1e-5, rtol=1e-5)

    # Exercise the multi-step grid + batch-padding path (B not a multiple of 128).
    x_big = jax.random.normal(kx2, (300, input_size), jnp.float32)
    out_big = fwd(x_big, w1t, b1c, w2t, b2c)
    jax.block_until_ready(out_big)
    ref_big = jnp.maximum(x_big @ w1 + b1, 0.0) @ w2 + b2
    assert out_big.shape == (300, output_size)
    assert jnp.allclose(out_big, ref_big, atol=1e-5, rtol=1e-5)

    print("KERNEL_OK")
</pallas_src>

<mosaic_0001>
module attributes {stable_mosaic.version = 11 : i64} {
  func.func @_mlp_kernel(%arg0: i32, %arg1: memref<8x128xf32, #tpu.memory_space<vmem>>, %arg2: memref<32x8xf32, #tpu.memory_space<vmem>>, %arg3: memref<32x1xf32, #tpu.memory_space<vmem>>, %arg4: memref<8x32xf32, #tpu.memory_space<vmem>>, %arg5: memref<8x1xf32, #tpu.memory_space<vmem>>, %arg6: memref<8x128xf32, #tpu.memory_space<vmem>>) attributes {dimension_semantics = [#tpu.dimension_semantics<parallel>], iteration_bounds = array<i64: 1>, scalar_prefetch = 0 : i64, scratch_operands = 0 : i64, tpu.core_type = #tpu.core_type<tc>, window_params = [{transform_indices = @transform_0, window_bounds = array<i64: 8, 128>}, {pipeline_mode = #tpu.pipeline_mode<synchronous>, transform_indices = @transform_1, window_bounds = array<i64: 32, 8>}, {pipeline_mode = #tpu.pipeline_mode<synchronous>, transform_indices = @transform_2, window_bounds = array<i64: 32, 1>}, {pipeline_mode = #tpu.pipeline_mode<synchronous>, transform_indices = @transform_3, window_bounds = array<i64: 8, 32>}, {pipeline_mode = #tpu.pipeline_mode<synchronous>, transform_indices = @transform_4, window_bounds = array<i64: 8, 1>}, {transform_indices = @transform_5, window_bounds = array<i64: 8, 128>}]} {
    %c0 = arith.constant 0 : index
    %c0_0 = arith.constant 0 : index
    %0 = vector.load %arg2[%c0, %c0_0] : memref<32x8xf32, #tpu.memory_space<vmem>>, vector<32x8xf32>
    %c0_1 = arith.constant 0 : index
    %c0_2 = arith.constant 0 : index
    %1 = vector.load %arg1[%c0_1, %c0_2] : memref<8x128xf32, #tpu.memory_space<vmem>>, vector<8x128xf32>
    %cst = arith.constant dense<0.000000e+00> : vector<32x128xf32>
    %2 = tpu.matmul %0, %1, %cst {dimension_numbers = #tpu.dot_dimension_numbers<[1], [0], [0], [1], [0, 0, 1, 1], [], []>} : vector<32x8xf32>, vector<8x128xf32>, vector<32x128xf32> -> vector<32x128xf32>
    %c0_3 = arith.constant 0 : index
    %c0_4 = arith.constant 0 : index
    %3 = vector.load %arg3[%c0_3, %c0_4] : memref<32x1xf32, #tpu.memory_space<vmem>>, vector<32x1xf32>
    %4 = vector.broadcast %3 : vector<32x1xf32> to vector<32x128xf32>
    %5 = arith.addf %2, %4 : vector<32x128xf32>
    %cst_5 = arith.constant 0.000000e+00 : f32
    %6 = vector.broadcast %cst_5 : f32 to vector<32x128xf32>
    %7 = arith.maximumf %5, %6 : vector<32x128xf32>
    %c0_6 = arith.constant 0 : index
    %c0_7 = arith.constant 0 : index
    %8 = vector.load %arg4[%c0_6, %c0_7] : memref<8x32xf32, #tpu.memory_space<vmem>>, vector<8x32xf32>
    %cst_8 = arith.constant dense<0.000000e+00> : vector<8x128xf32>
    %9 = tpu.matmul %8, %7, %cst_8 {dimension_numbers = #tpu.dot_dimension_numbers<[1], [0], [0], [1], [0, 0, 1, 1], [], []>} : vector<8x32xf32>, vector<32x128xf32>, vector<8x128xf32> -> vector<8x128xf32>
    %c0_9 = arith.constant 0 : index
    %c0_10 = arith.constant 0 : index
    %10 = vector.load %arg5[%c0_9, %c0_10] : memref<8x1xf32, #tpu.memory_space<vmem>>, vector<8x1xf32>
    %11 = vector.broadcast %10 : vector<8x1xf32> to vector<8x128xf32>
    %12 = arith.addf %9, %11 : vector<8x128xf32>
    %c0_11 = arith.constant 0 : index
    %c0_12 = arith.constant 0 : index
    %13 = vector.load %arg6[%c0_11, %c0_12] : memref<8x128xf32, #tpu.memory_space<vmem>>, vector<8x128xf32>
    tpu.vector_store %arg6[%c0_11, %c0_12], %12 {strides = array<i32>} : memref<8x128xf32, #tpu.memory_space<vmem>>, vector<8x128xf32>,
    return
  }
  func.func @transform_0(%arg0: i32) -> (i32, i32) {
    %c0_i32 = arith.constant 0 : i32
    %c0_i32_0 = arith.constant 0 : i32
    return %c0_i32, %arg0 : i32, i32
  }
  func.func @transform_1(%arg0: i32) -> (i32, i32) {
    %c0_i32 = arith.constant 0 : i32
    %c0_i32_0 = arith.constant 0 : i32
    %c0_i32_1 = arith.constant 0 : i32
    return %c0_i32, %c0_i32_0 : i32, i32
  }
  func.func @transform_2(%arg0: i32) -> (i32, i32) {
    %c0_i32 = arith.constant 0 : i32
    %c0_i32_0 = arith.constant 0 : i32
    %c0_i32_1 = arith.constant 0 : i32
    return %c0_i32, %c0_i32_0 : i32, i32
  }
  func.func @transform_3(%arg0: i32) -> (i32, i32) {
    %c0_i32 = arith.constant 0 : i32
    %c0_i32_0 = arith.constant 0 : i32
    %c0_i32_1 = arith.constant 0 : i32
    return %c0_i32, %c0_i32_0 : i32, i32
  }
  func.func @transform_4(%arg0: i32) -> (i32, i32) {
    %c0_i32 = arith.constant 0 : i32
    %c0_i32_0 = arith.constant 0 : i32
    %c0_i32_1 = arith.constant 0 : i32
    return %c0_i32, %c0_i32_0 : i32, i32
  }
  func.func @transform_5(%arg0: i32) -> (i32, i32) {
    %c0_i32 = arith.constant 0 : i32
    %c0_i32_0 = arith.constant 0 : i32
    return %c0_i32, %arg0 : i32, i32
  }
}

</mosaic_0001>

<llo_original>
// kernel: blackjack_forward.1
$region0: #{blackjack_forward.1}
  #allocation0 [shape = 'u32[]', space=smem, size = 0x4, offset = 0x4, fixed_abs, tag = 'smem constant byte address 0x4 - core index']
  #allocation1 [shape = 'u32[72,128]{1,0:T(1,128)}', space=vmem, size = 0x9000, scoped, tag = 'internal scratch']
  %s0 = inlined_call_operand.vmem [shape: f32[8,128], index: 0, kind: input, shape index: {}]
  %s1 = inlined_call_operand.vmem [shape: f32[32,8], index: 1, kind: input, shape index: {}]
  %s2 = inlined_call_operand.vmem [shape: f32[32,1], index: 2, kind: input, shape index: {}]
  %s3 = inlined_call_operand.vmem [shape: f32[8,32], index: 3, kind: input, shape index: {}]
  %s4 = inlined_call_operand.vmem [shape: f32[8,1], index: 4, kind: input, shape index: {}]
  %s5 = inlined_call_operand.vmem [shape: f32[8,128], index: 5, kind: output, shape index: {}]
  %s6 = sld [smem:[#allocation0]]
  $region30: #{blackjack_forward.1} parent=0
    _
  %s8 = ssub.s32 1, %s6
  %s9 = scalar_select 0, %s8, %s6
  // Predicated region
  $region2: #{blackjack_forward.1} parent=0 // pred_check
    _
  $region3: #{blackjack_forward.1} parent=0 // pred_check_branch
    %11 = sbr.rel (0) target = $region5
  $region4: #{blackjack_forward.1} parent=0 // pred_region
    _
  $region5: #{blackjack_forward.1} parent=0 // pred_fallthru
    _
  // Predicated region
  $region6: #{blackjack_forward.1} parent=0 // pred_check
    _
  $region7: #{blackjack_forward.1} parent=0 // pred_check_branch
    %13 = sbr.rel (0) target = $region9
  $region8: #{blackjack_forward.1} parent=0 // pred_region
    _
  $region9: #{blackjack_forward.1} parent=0 // pred_fallthru
    _
  // Predicated region
  $region10: #{blackjack_forward.1} parent=0 // pred_check
    _
  $region11: #{blackjack_forward.1} parent=0 // pred_check_branch
    %15 = sbr.rel (0) target = $region13
  $region12: #{blackjack_forward.1} parent=0 // pred_region
    _
  $region13: #{blackjack_forward.1} parent=0 // pred_fallthru
    _
  // Predicated region
  $region14: #{blackjack_forward.1} parent=0 // pred_check
    _
  $region15: #{blackjack_forward.1} parent=0 // pred_check_branch
    %17 = sbr.rel (0) target = $region17
  $region16: #{blackjack_forward.1} parent=0 // pred_region
    _
  $region17: #{blackjack_forward.1} parent=0 // pred_fallthru
    _
  // Predicated region
  $region18: #{blackjack_forward.1} parent=0 // pred_check
    _
  $region19: #{blackjack_forward.1} parent=0 // pred_check_branch
    %19 = sbr.rel (0) target = $region21
  $region20: #{blackjack_forward.1} parent=0 // pred_region
    _
  $region21: #{blackjack_forward.1} parent=0 // pred_fallthru
    _
  %v20 = vld [vmem:[%s1] sm:$0xff]
  %v21 = vld [vmem:[%s1 + $0x8] sm:$0xff]
  %v22 = vld [vmem:[%s1 + $0x10] sm:$0xff]
  %v23 = vld [vmem:[%s1 + $0x18] sm:$0xff]
  %v24 = vld [vmem:[%s0] sm:$0xff]
  %v25 = vld [vmem:[%s2] sm:$0xff]
  %v26 = vld [vmem:[%s2 + $0x8] sm:$0xff]
  %v27 = vld [vmem:[%s2 + $0x10] sm:$0xff]
  %v28 = vld [vmem:[%s2 + $0x18] sm:$0xff]
  %30 = vset.pattern.permute.xlu0 0
  %31 = vperm.xlu0 %30, %v25
  %v32 = vpop.permute.xlu0 %31
  %35 = vset.pattern.permute.xlu0 0
  %36 = vperm.xlu0 %35, %v26
  %v37 = vpop.permute.xlu0 %36
  %40 = vset.pattern.permute.xlu0 0
  %41 = vperm.xlu0 %40, %v27
  %v42 = vpop.permute.xlu0 %41
  %45 = vset.pattern.permute.xlu0 0
  %46 = vperm.xlu0 %45, %v28
  %v47 = vpop.permute.xlu0 %46
  %vm49 = vcmask 64512
  %v51 = vsel %vm49, %v20, 0
  %v54 = vsel %vm49, %v21, 0
  %v57 = vsel %vm49, %v22, 0
  %v60 = vsel %vm49, %v23, 0
  %62 = vmatpush.msra.mxu0 0.0
  %63 = vmatpush.msra.mxu0 0.0
  %64 = vmatpush.msra.mxu0 0.0
  %65 = vmatpush.msra.mxu0 0.0
  %66 = vmatpush.msra.mxu0 0.0
  %67 = vmatpush.msra.mxu0 0.0
  %68 = vmatpush.msra.mxu0 0.0
  %69 = vmatpush.msra.mxu0 0.0
  %70 = vmatpush.msra.mxu0 0.0
  %71 = vmatpush.msra.mxu0 0.0
  %72 = vmatpush.msra.mxu0 0.0
  %73 = vmatpush.msra.mxu0 0.0
  %74 = vmatpush.msra.mxu0 0.0
  %75 = vmatpush.msra.mxu0 0.0
  %76 = vmatpush.msra.mxu0 0.0
  %77 = vmatpush.msra.mxu0 %v24
  %78 = vmatmul.f32.gmra.mxu0 %v51
  %v79 = vpop.f32.mrf.mxu0
  %v80 = vadd.f32 %v32, %v79
  %81 = vmatmul.f32.gmra.mxu0 %v54
  %v82 = vpop.f32.mrf.mxu0
  %v83 = vadd.f32 %v37, %v82
  %84 = vmatmul.f32.gmra.mxu0 %v57
  %v85 = vpop.f32.mrf.mxu0
  %v86 = vadd.f32 %v42, %v85
  %87 = vmatmul.f32.gmra.mxu0 %v60
  %v88 = vpop.f32.mrf.mxu0
  %v89 = vadd.f32 %v47, %v88
  %90 = vdwg.mxu0
  %v91 = vmax.f32 %v80, 0.0
  %v92 = vmax.f32 %v83, 0.0
  %v93 = vmax.f32 %v86, 0.0
  %v94 = vmax.f32 %v89, 0.0
  %v95 = vld [vmem:[%s3] sm:$0xff]
  %v96 = vld [vmem:[%s4] sm:$0xff]
  %98 = vset.pattern.permute.xlu0 0
  %99 = vperm.xlu0 %98, %v96
  %v100 = vpop.permute.xlu0 %99
  %vm102 = vcmask 261120
  %v104 = vsel %vm102, %v95, 0
  %106 = vmatpush.msra.mxu0 0.0
  %107 = vmatpush.msra.mxu0 0.0
  %108 = vmatpush.msra.mxu0 0.0
  %109 = vmatpush.msra.mxu0 0.0
  %110 = vmatpush.msra.mxu0 0.0
  %111 = vmatpush.msra.mxu0 0.0
  %112 = vmatpush.msra.mxu0 0.0
  %113 = vmatpush.msra.mxu0 0.0
  %114 = vmatpush.msra.mxu0 0.0
  %115 = vmatpush.msra.mxu0 0.0
  %116 = vmatpush.msra.mxu0 0.0
  %117 = vmatpush.msra.mxu0 0.0
  %118 = vmatpush.msra.mxu0 %v94
  %119 = vmatpush.msra.mxu0 %v93
  %120 = vmatpush.msra.mxu0 %v92
  %121 = vmatpush.msra.mxu0 %v91
  %122 = vmatmul.f32.gmra.mxu0 %v104
  %v123 = vpop.f32.mrf.mxu0
  %v124 = vadd.f32 %v100, %v123
  %125 = vdwg.mxu0
  %126 = vst [vmem:[%s5] sm:$0xff] %v124
  // Predicated region
  $region22: #{blackjack_forward.1} parent=0 // pred_check
    _
  $region23: #{blackjack_forward.1} parent=0 // pred_check_branch
    %128 = sbr.rel (0) target = $region25
  $region24: #{blackjack_forward.1} parent=0 // pred_region
    _
  $region25: #{blackjack_forward.1} parent=0 // pred_fallthru
    _
  // Predicated region
  $region26: #{blackjack_forward.1} parent=0 // pred_check
    _
  $region27: #{blackjack_forward.1} parent=0 // pred_check_branch
    %130 = sbr.rel (0) target = $region29
  $region28: #{blackjack_forward.1} parent=0 // pred_region
    _
  $region29: #{blackjack_forward.1} parent=0 // pred_fallthru
    _

</llo_original>
